<compile_context>
chip_gen: v5e
topology: v5e:2x2
jax: 0.10.0
libtpu: 0.0.40
codegen_flags: <defaults>
</compile_context>

<pallas_src>
import functools

import jax
import jax.numpy as jnp
from jax.experimental import pallas as pl
from jax.experimental.pallas import tpu as pltpu

_F32_BYTES = 4


# ----------------------------------------------------------------------------
# Kernels
# ----------------------------------------------------------------------------

def _layernorm_fused_kernel(x_ref, gamma_ref, beta_ref, o_ref, *, eps, n_elems):
    """Whole sample row resident in VMEM: fused stats + normalize + affine."""
    # x_ref: (chunk, N) lane-dense; gamma_ref/beta_ref: (1, N); o_ref: (chunk, N)
    x = x_ref[...].astype(jnp.float32)

    # Per-sample mean over the lane axis.
    mean = jnp.sum(x, axis=1, keepdims=True) * (1.0 / n_elems)          # (chunk, 1)

    # Two-pass (centered), unbiased variance (torch.std default: / (N-1)).
    xc = x - mean
    var = jnp.sum(xc * xc, axis=1, keepdims=True) * (1.0 / max(n_elems - 1.0, 1.0))

    # Reference normalizes by (std + eps): per-sample reciprocal, then multiply.
    inv = 1.0 / (jnp.sqrt(var) + eps)                                   # (chunk, 1)

    y = (xc * inv) * gamma_ref[...] + beta_ref[...]
    o_ref[...] = y.astype(o_ref.dtype)


def _layernorm_tiled_kernel(x_ref, gamma_ref, beta_ref, o_ref,
                            sum_ref, sq_ref, mean_ref, inv_ref,
                            *, eps, n_elems, n_tiles):
    """Reduction-tiled fallback: grid axis 1 makes two passes over N tiles.

    Pass 1 (s < n_tiles): accumulate per-sample sum / sum-of-squares.
    Pass 2 (s >= n_tiles): normalize each tile with the finalized stats.
    """
    s = pl.program_id(1)

    @pl.when(s == 0)
    def _():
        sum_ref[...] = jnp.zeros_like(sum_ref)
        sq_ref[...] = jnp.zeros_like(sq_ref)

    @pl.when(s < n_tiles)                       # pass 1: accumulate statistics
    def _():
        x = x_ref[...].astype(jnp.float32)
        sum_ref[...] = sum_ref[...] + jnp.sum(x, axis=1, keepdims=True)
        sq_ref[...] = sq_ref[...] + jnp.sum(x * x, axis=1, keepdims=True)

    @pl.when(s == n_tiles - 1)                  # finalize mean and 1/(std+eps)
    def _():
        mean = sum_ref[...] * (1.0 / n_elems)
        # One-pass (sum/sumsq) unbiased variance for the tiled path; clamped
        # at 0 to guard against cancellation.
        var = (sq_ref[...] - n_elems * mean * mean) * (1.0 / max(n_elems - 1.0, 1.0))
        var = jnp.maximum(var, 0.0)
        mean_ref[...] = mean
        inv_ref[...] = 1.0 / (jnp.sqrt(var) + eps)

    @pl.when(s >= n_tiles)                      # pass 2: normalize + affine
    def _():
        x = x_ref[...].astype(jnp.float32)
        y = (x - mean_ref[...]) * inv_ref[...]
        y = y * gamma_ref[...] + beta_ref[...]
        o_ref[...] = y.astype(o_ref.dtype)


# ----------------------------------------------------------------------------
# Tiling heuristics
# ----------------------------------------------------------------------------

def _chunk_candidates(batch):
    """Batch-chunk sizes keeping the sublane axis layout-legal:
    multiples of 8 that divide B, plus B itself (full-dim block)."""
    cands = {batch}
    for c in range(8, batch, 8):
        if batch % c == 0:
            cands.add(c)
    return sorted(cands)


def _bytes_per_elem(in_isz, out_isz):
    # 2x double-buffered input + 2x double-buffered output + ~3 f32 temporaries
    # (x.astype(f32), xc, y) the kernel materializes per block element.
    return 2 * in_isz + 2 * out_isz + 3 * _F32_BYTES


def _vmem_limit_bytes(block_elems, row_width, in_isz, out_isz):
    needed = (block_elems * _bytes_per_elem(in_isz, out_isz)
              + 4 * row_width * _F32_BYTES       # gamma/beta blocks (2x dbuf)
              + (256 << 10))                     # scratch / semaphore margin
    # 2x headroom for compiler-internal scratch, capped well below v7x's
    # 64 MiB physical per-TC VMEM (never request the whole thing).
    return int(min(max(2 * needed, 8 << 20), 48 << 20))


# ----------------------------------------------------------------------------
# Wrapper
# ----------------------------------------------------------------------------

def layer_norm(x, gamma=None, beta=None, *, eps=1e-5, affine=True,
               block_bytes=2 << 20, force_tiled=False):
    """Forward pass of the custom LayerNorm module.

    x:     (B, C, *spatial)  -- channels on axis 1 (as in the PyTorch module).
    gamma: (C,) scale, beta: (C,) shift (used iff affine).
    block_bytes: target bytes of one input block (1-4 MiB sweet spot).
    force_tiled: force the reduction-tiled fallback path (for testing).
    """
    B, C = int(x.shape[0]), int(x.shape[1])
    P = 1
    for d in x.shape[2:]:
        P *= int(d)
    P = max(P, 1)
    N = C * P

    if not affine or gamma is None:
        gamma = jnp.ones((C,), jnp.float32)
    if not affine or beta is None:
        beta = jnp.zeros((C,), jnp.float32)

    # Lane-dense layout: one sample == one row of length N = C*P.  Per-channel
    # affine pre-expanded to a lane-dense (1, N) row once in the wrapper.
    xf = x.reshape(B, N)
    gamma_row = jnp.repeat(gamma.astype(jnp.float32), P).reshape(1, N)
    beta_row = jnp.repeat(beta.astype(jnp.float32), P).reshape(1, N)

    in_isz = int(x.dtype.itemsize)
    out_isz = in_isz
    cands = _chunk_candidates(B)

    # --- decide fused vs. reduction-tiled ------------------------------------
    fused_cands = [c for c in cands if c * N * in_isz <= block_bytes]
    use_tiled = force_tiled or not fused_cands

    tile_n = None
    if use_tiled:
        chunk = min(cands)                  # smallest layout-legal batch chunk
        t = 128
        while t <= N:
            if N % t == 0 and chunk * t * in_isz <= block_bytes:
                tile_n = t
            t += 128
        if tile_n is None or tile_n == N:
            # N not cleanly 128-tileable (or a full row already fits): best
            # effort fused path at the smallest chunk with VMEM headroom.
            use_tiled = False
            fused_cands = [chunk]

    # --- fused path: whole sample row per block ------------------------------
    if not use_tiled:
        multi = [c for c in fused_cands if B // c >= 2]   # keep >= 2 grid steps
        chunk = max(multi) if multi else max(fused_cands)

        kernel = functools.partial(_layernorm_fused_kernel,
                                   eps=float(eps), n_elems=float(N))
        out = pl.pallas_call(
            kernel,
            out_shape=jax.ShapeDtypeStruct((B, N), x.dtype),
            grid=(B // chunk,),
            in_specs=[
                pl.BlockSpec((chunk, N), lambda i: (i, 0)),
                pl.BlockSpec((1, N), lambda i: (0, 0)),
                pl.BlockSpec((1, N), lambda i: (0, 0)),
            ],
            out_specs=pl.BlockSpec((chunk, N), lambda i: (i, 0)),
            compiler_params=pltpu.CompilerParams(
                dimension_semantics=("parallel",),        # v7x: shard batch
                vmem_limit_bytes=_vmem_limit_bytes(chunk * N, N, in_isz, out_isz),
            ),
        )(xf, gamma_row, beta_row)
        return out.reshape(x.shape)

    # --- reduction-tiled fallback: two passes over the N axis ----------------
    n_tiles = N // tile_n
    kernel = functools.partial(_layernorm_tiled_kernel, eps=float(eps),
                               n_elems=float(N), n_tiles=n_tiles)

    x_map = lambda b, s, nt=n_tiles: (b, s % nt)
    gb_map = lambda b, s, nt=n_tiles: (0, s % nt)
    # Pass 1 parks the (unwritten) output block at column 0 so no garbage is
    # ever flushed to HBM; pass 2 walks the real column tiles.
    o_map = lambda b, s, nt=n_tiles: (b, jnp.where(s < nt, 0, s - nt))

    out = pl.pallas_call(
        kernel,
        out_shape=jax.ShapeDtypeStruct((B, N), x.dtype),
        grid=(B // chunk, 2 * n_tiles),
        in_specs=[
            pl.BlockSpec((chunk, tile_n), x_map),
            pl.BlockSpec((1, tile_n), gb_map),
            pl.BlockSpec((1, tile_n), gb_map),
        ],
        out_specs=pl.BlockSpec((chunk, tile_n), o_map),
        scratch_shapes=[
            pltpu.VMEM((chunk, 1), jnp.float32),   # running sum
            pltpu.VMEM((chunk, 1), jnp.float32),   # running sum of squares
            pltpu.VMEM((chunk, 1), jnp.float32),   # mean
            pltpu.VMEM((chunk, 1), jnp.float32),   # 1 / (std + eps)
        ],
        compiler_params=pltpu.CompilerParams(
            dimension_semantics=("parallel", "arbitrary"),
            vmem_limit_bytes=_vmem_limit_bytes(chunk * tile_n, tile_n,
                                               in_isz, out_isz),
        ),
    )(xf, gamma_row, beta_row)
    return out.reshape(x.shape)


# ----------------------------------------------------------------------------
# Pure-JAX reference (mirrors the PyTorch module exactly) for validation
# ----------------------------------------------------------------------------

def layer_norm_ref(x, gamma, beta, eps=1e-5):
    B = x.shape[0]
    xf = x.reshape(B, -1).astype(jnp.float32)
    mean = xf.mean(axis=1)
    n = xf.shape[1]
    var = jnp.sum((xf - mean[:, None]) ** 2, axis=1) / max(n - 1, 1)   # unbiased
    std = jnp.sqrt(var)
    bshape = (-1,) + (1,) * (x.ndim - 1)
    y = (x.astype(jnp.float32) - mean.reshape(bshape)) / (std.reshape(bshape) + eps)
    cshape = (1, -1) + (1,) * (x.ndim - 2)
    return y * gamma.reshape(cshape) + beta.reshape(cshape)


# ----------------------------------------------------------------------------
# Demo / self-test
# ----------------------------------------------------------------------------

if __name__ == "__main__":
    key = jax.random.PRNGKey(0)
    k_x, k_g, k_x2 = jax.random.split(key, 3)

    # Small NCHW feature map consistent with the module.
    B, C, H, W = 2, 4, 16, 16
    x = jax.random.normal(k_x, (B, C, H, W), jnp.float32)
    gamma = jax.random.uniform(k_g, (C,), jnp.float32)     # torch .uniform_()
    beta = jnp.zeros((C,), jnp.float32)

    fwd = jax.jit(functools.partial(layer_norm, eps=1e-5, affine=True))
    out = jax.block_until_ready(fwd(x, gamma, beta))
    ref = layer_norm_ref(x, gamma, beta, eps=1e-5)
    assert out.shape == x.shape
    assert bool(jnp.all(jnp.isfinite(out)))
    assert bool(jnp.allclose(out, ref, rtol=1e-5, atol=1e-5)), "fused path mismatch"

    # Multi-step grid: sublane-aligned batch chunks with >= 2 grid steps.
    B2, C2, H2, W2 = 16, 4, 8, 8
    x2 = jax.random.normal(k_x2, (B2, C2, H2, W2), jnp.float32)
    g2 = jax.random.uniform(k_g, (C2,), jnp.float32)
    b2 = jnp.zeros((C2,), jnp.float32)
    out2 = jax.block_until_ready(
        jax.jit(functools.partial(layer_norm, eps=1e-5, affine=True))(x2, g2, b2))
    ref2 = layer_norm_ref(x2, g2, b2, eps=1e-5)
    assert bool(jnp.allclose(out2, ref2, rtol=1e-5, atol=1e-5)), "multi-chunk mismatch"

    # Reduction-tiled fallback path (forced small block budget -> 4 N-tiles).
    out3 = jax.block_until_ready(
        jax.jit(functools.partial(layer_norm, eps=1e-5, affine=True,
                                  force_tiled=True, block_bytes=2048))(x, gamma, beta))
    assert bool(jnp.all(jnp.isfinite(out3)))
    assert bool(jnp.allclose(out3, ref, rtol=1e-4, atol=1e-4)), "tiled path mismatch"

    print("KERNEL_OK")
</pallas_src>

<mosaic_0001>
module attributes {stable_mosaic.version = 11 : i64} {
  func.func @_layernorm_fused_kernel(%arg0: i32, %arg1: memref<2x1024xf32, #tpu.memory_space<vmem>>, %arg2: memref<1x1024xf32, #tpu.memory_space<vmem>>, %arg3: memref<1x1024xf32, #tpu.memory_space<vmem>>, %arg4: memref<2x1024xf32, #tpu.memory_space<vmem>>) attributes {dimension_semantics = [#tpu.dimension_semantics<parallel>], iteration_bounds = array<i64: 1>, scalar_prefetch = 0 : i64, scratch_operands = 0 : i64, tpu.core_type = #tpu.core_type<tc>, window_params = [{transform_indices = @transform_0, window_bounds = array<i64: 2, 1024>}, {pipeline_mode = #tpu.pipeline_mode<synchronous>, transform_indices = @transform_1, window_bounds = array<i64: 1, 1024>}, {pipeline_mode = #tpu.pipeline_mode<synchronous>, transform_indices = @transform_2, window_bounds = array<i64: 1, 1024>}, {transform_indices = @transform_3, window_bounds = array<i64: 2, 1024>}]} {
    %c0 = arith.constant 0 : index
    %c0_0 = arith.constant 0 : index
    %0 = vector.load %arg1[%c0, %c0_0] : memref<2x1024xf32, #tpu.memory_space<vmem>>, vector<2x1024xf32>
    %cst = arith.constant dense<0.000000e+00> : vector<2xf32>
    %1 = vector.multi_reduction <add>, %0, %cst [1] : vector<2x1024xf32> to vector<2xf32>
    %2 = vector.shape_cast %1 : vector<2xf32> to vector<2x1xf32>
    %cst_1 = arith.constant 9.765625E-4 : f32
    %3 = vector.broadcast %cst_1 : f32 to vector<2x1xf32>
    %4 = arith.mulf %2, %3 : vector<2x1xf32>
    %5 = vector.broadcast %4 : vector<2x1xf32> to vector<2x1024xf32>
    %6 = arith.subf %0, %5 : vector<2x1024xf32>
    %7 = arith.mulf %6, %6 : vector<2x1024xf32>
    %cst_2 = arith.constant dense<0.000000e+00> : vector<2xf32>
    %8 = vector.multi_reduction <add>, %7, %cst_2 [1] : vector<2x1024xf32> to vector<2xf32>
    %9 = vector.shape_cast %8 : vector<2xf32> to vector<2x1xf32>
    %cst_3 = arith.constant 9.77517105E-4 : f32
    %10 = vector.broadcast %cst_3 : f32 to vector<2x1xf32>
    %11 = arith.mulf %9, %10 : vector<2x1xf32>
    %12 = math.sqrt %11 : vector<2x1xf32>
    %cst_4 = arith.constant 9.99999974E-6 : f32
    %13 = vector.broadcast %cst_4 : f32 to vector<2x1xf32>
    %14 = arith.addf %12, %13 : vector<2x1xf32>
    %cst_5 = arith.constant 1.000000e+00 : f32
    %15 = vector.broadcast %cst_5 : f32 to vector<2x1xf32>
    %16 = arith.divf %15, %14 : vector<2x1xf32>
    %17 = vector.broadcast %16 : vector<2x1xf32> to vector<2x1024xf32>
    %18 = arith.mulf %6, %17 : vector<2x1024xf32>
    %c0_6 = arith.constant 0 : index
    %c0_7 = arith.constant 0 : index
    %19 = vector.load %arg2[%c0_6, %c0_7] : memref<1x1024xf32, #tpu.memory_space<vmem>>, vector<1x1024xf32>
    %20 = vector.broadcast %19 : vector<1x1024xf32> to vector<2x1024xf32>
    %21 = arith.mulf %18, %20 : vector<2x1024xf32>
    %c0_8 = arith.constant 0 : index
    %c0_9 = arith.constant 0 : index
    %22 = vector.load %arg3[%c0_8, %c0_9] : memref<1x1024xf32, #tpu.memory_space<vmem>>, vector<1x1024xf32>
    %23 = vector.broadcast %22 : vector<1x1024xf32> to vector<2x1024xf32>
    %24 = arith.addf %21, %23 : vector<2x1024xf32>
    %c0_10 = arith.constant 0 : index
    %c0_11 = arith.constant 0 : index
    %25 = vector.load %arg4[%c0_10, %c0_11] : memref<2x1024xf32, #tpu.memory_space<vmem>>, vector<2x1024xf32>
    tpu.vector_store %arg4[%c0_10, %c0_11], %24 {strides = array<i32>} : memref<2x1024xf32, #tpu.memory_space<vmem>>, vector<2x1024xf32>,
    return
  }
  func.func @transform_0(%arg0: i32) -> (i32, i32) {
    %c0_i32 = arith.constant 0 : i32
    %c0_i32_0 = arith.constant 0 : i32
    return %arg0, %c0_i32 : i32, i32
  }
  func.func @transform_1(%arg0: i32) -> (i32, i32) {
    %c0_i32 = arith.constant 0 : i32
    %c0_i32_0 = arith.constant 0 : i32
    %c0_i32_1 = arith.constant 0 : i32
    return %c0_i32, %c0_i32_0 : i32, i32
  }
  func.func @transform_2(%arg0: i32) -> (i32, i32) {
    %c0_i32 = arith.constant 0 : i32
    %c0_i32_0 = arith.constant 0 : i32
    %c0_i32_1 = arith.constant 0 : i32
    return %c0_i32, %c0_i32_0 : i32, i32
  }
  func.func @transform_3(%arg0: i32) -> (i32, i32) {
    %c0_i32 = arith.constant 0 : i32
    %c0_i32_0 = arith.constant 0 : i32
    return %arg0, %c0_i32 : i32, i32
  }
}

</mosaic_0001>

<llo_original>
// kernel: layer_norm.1
$region0: #{layer_norm.1}
  #allocation0 [shape = 'u32[]', space=smem, size = 0x4, offset = 0x4, fixed_abs, tag = 'smem constant byte address 0x4 - core index']
  #allocation1 [shape = 'u32[72,128]{1,0:T(1,128)}', space=vmem, size = 0x9000, scoped, tag = 'internal scratch']
  %s0 = inlined_call_operand.vmem [shape: f32[2,1024], index: 0, kind: input, shape index: {}]
  %s1 = inlined_call_operand.vmem [shape: f32[1,1024], index: 1, kind: input, shape index: {}]
  %s2 = inlined_call_operand.vmem [shape: f32[1,1024], index: 2, kind: input, shape index: {}]
  %s3 = inlined_call_operand.vmem [shape: f32[2,1024], index: 3, kind: output, shape index: {}]
  %s4 = sld [smem:[#allocation0]]
  $region22: #{layer_norm.1} parent=0
    _
  %s6 = ssub.s32 1, %s4
  %s7 = scalar_select 0, %s6, %s4
  // Predicated region
  $region2: #{layer_norm.1} parent=0 // pred_check
    _
  $region3: #{layer_norm.1} parent=0 // pred_check_branch
    %9 = sbr.rel (0) target = $region5
  $region4: #{layer_norm.1} parent=0 // pred_region
    _
  $region5: #{layer_norm.1} parent=0 // pred_fallthru
    _
  // Predicated region
  $region6: #{layer_norm.1} parent=0 // pred_check
    _
  $region7: #{layer_norm.1} parent=0 // pred_check_branch
    %11 = sbr.rel (0) target = $region9
  $region8: #{layer_norm.1} parent=0 // pred_region
    _
  $region9: #{layer_norm.1} parent=0 // pred_fallthru
    _
  // Predicated region
  $region10: #{layer_norm.1} parent=0 // pred_check
    _
  $region11: #{layer_norm.1} parent=0 // pred_check_branch
    %13 = sbr.rel (0) target = $region13
  $region12: #{layer_norm.1} parent=0 // pred_region
    _
  $region13: #{layer_norm.1} parent=0 // pred_fallthru
    _
  %v14 = vld [vmem:[%s0] sm:$0xff]
  %v15 = vld [vmem:[%s0 + $0x8] sm:$0xff]
  %18 = vst [vmem:[#allocation1] ss:$4 sm:$0xff] %v14
  %s19 = scalar_lea.vmem [#allocation1], 32
  %20 = vst [vmem:[%s19] ss:$4 sm:$0xff] %v15
  %v21 = vld.sshfl [vmem:[#allocation1] sm:$0xff pattern:$0x73625140]
  %v22 = vld.sshfl [vmem:[#allocation1 + $0x8] sm:$0xff pattern:$0x73625140]
  %v23 = vld.sshfl [vmem:[#allocation1 + $0x10] sm:$0xff pattern:$0x73625140]
  %v24 = vld.sshfl [vmem:[#allocation1 + $0x18] sm:$0xff pattern:$0x73625140]
  %v25 = vld.sshfl [vmem:[#allocation1 + $0x20] sm:$0xff pattern:$0x73625140]
  %v26 = vld.sshfl [vmem:[#allocation1 + $0x28] sm:$0xff pattern:$0x73625140]
  %v27 = vld.sshfl [vmem:[#allocation1 + $0x30] sm:$0xff pattern:$0x73625140]
  %v28 = vld.sshfl [vmem:[#allocation1 + $0x38] sm:$0xff pattern:$0x73625140]
  %vm37 = vcmask 1041408
  %v38 = vsel %vm37, %v21, 0.0
  %v39 = vsel %vm37, %v22, 0.0
  %v40 = vadd.f32 %v38, %v39
  %v41 = vsel %vm37, %v23, 0.0
  %v42 = vadd.f32 %v40, %v41
  %v43 = vsel %vm37, %v24, 0.0
  %v44 = vadd.f32 %v42, %v43
  %v45 = vsel %vm37, %v25, 0.0
  %v46 = vadd.f32 %v44, %v45
  %v47 = vsel %vm37, %v26, 0.0
  %v48 = vadd.f32 %v46, %v47
  %v49 = vsel %vm37, %v27, 0.0
  %v50 = vadd.f32 %v48, %v49
  %v51 = vsel %vm37, %v28, 0.0
  %v52 = vadd.f32 %v50, %v51
  %53 = vadd.xlane.f32.xlu0 %v52
  %v54 = vpop.xlane.xlu0 %53
  %v55 = vmul.f32 %v54, 0.0009765625
  %v58 = vunpack.c.l.s4 269488144
  %v59 = vunpack.c.0.s8 %v58
  %v60 = vperm.slane %v55, %v59
  %v62 = vsub.f32 %v14, %v60
  %v63 = vsub.f32 %v15, %v60
  %v64 = vmul.f32 %v62, %v62
  %v65 = vmul.f32 %v63, %v63
  %68 = vst [vmem:[#allocation1] ss:$4 sm:$0xff] %v64
  %s69 = scalar_lea.vmem [#allocation1], 32
  %70 = vst [vmem:[%s69] ss:$4 sm:$0xff] %v65
  %v71 = vld.sshfl [vmem:[#allocation1] sm:$0xff pattern:$0x73625140]
  %v72 = vld.sshfl [vmem:[#allocation1 + $0x8] sm:$0xff pattern:$0x73625140]
  %v73 = vld.sshfl [vmem:[#allocation1 + $0x10] sm:$0xff pattern:$0x73625140]
  %v74 = vld.sshfl [vmem:[#allocation1 + $0x18] sm:$0xff pattern:$0x73625140]
  %v75 = vld.sshfl [vmem:[#allocation1 + $0x20] sm:$0xff pattern:$0x73625140]
  %v76 = vld.sshfl [vmem:[#allocation1 + $0x28] sm:$0xff pattern:$0x73625140]
  %v77 = vld.sshfl [vmem:[#allocation1 + $0x30] sm:$0xff pattern:$0x73625140]
  %v78 = vld.sshfl [vmem:[#allocation1 + $0x38] sm:$0xff pattern:$0x73625140]
  %v87 = vsel %vm37, %v71, 0.0
  %v88 = vsel %vm37, %v72, 0.0
  %v89 = vadd.f32 %v87, %v88
  %v90 = vsel %vm37, %v73, 0.0
  %v91 = vadd.f32 %v89, %v90
  %v92 = vsel %vm37, %v74, 0.0
  %v93 = vadd.f32 %v91, %v92
  %v94 = vsel %vm37, %v75, 0.0
  %v95 = vadd.f32 %v93, %v94
  %v96 = vsel %vm37, %v76, 0.0
  %v97 = vadd.f32 %v95, %v96
  %v98 = vsel %vm37, %v77, 0.0
  %v99 = vadd.f32 %v97, %v98
  %v100 = vsel %vm37, %v78, 0.0
  %v101 = vadd.f32 %v99, %v100
  %102 = vadd.xlane.f32.xlu0 %v101
  %v103 = vpop.xlane.xlu0 %102
  %v104 = vmul.f32 %v103, 0.0009775171
  %v105 = vrsqrt.pop %v104
  %v106 = vmul.f32 %v105, %v104
  %v107 = vmul.f32 %v106, %v105
  %v108 = vmul.f32 0.5, %v107
  %v109 = vsub.f32 1.5, %v108
  %v110 = vmul.f32 %v105, %v109
  %v111 = vmul.f32 %v104, %v110
  %vm112 = vcmp.eq.f32.partialorder %v104, inf
  %v113 = vsel %vm112, %v104, %v111
  %vm114 = vcmp.eq.f32.partialorder %v104, 0.0
  %v115 = vand.u32 %v104, 2147483648
  %v116 = vsel %vm114, %v115, %v113
  %v117 = vadd.f32 %v116, 1e-05
  %v118 = vrcp.pop %v117
  %v119 = vmul.f32 %v117, %v118
  %v120 = vsub.f32 1.0, %v119
  %v121 = vmul.f32 %v118, %v120
  %v122 = vadd.f32 %v118, %v121
  %vm123 = vweird.f32 %v117
  %vm124 = vweird.f32 %v118
  %vm125 = vmor %vm123, %vm124
  %v126 = vsel %vm125, %v118, %v122
  %v127 = vand.u32 2147483647, %v117
  %vm128 = vcmp.eq.f32.partialorder %v127, 8.507059e+37
  %v129 = vand.u32 %v117, 2147483648
  %v130 = vor.u32 1.1754944e-38, %v129
  %v131 = vsel %vm128, %v130, %v126
  %v132 = vmul.f32 1.0, %v131
  %v135 = vunpack.c.l.s4 269488144
  %v136 = vunpack.c.0.s8 %v135
  %v137 = vperm.slane %v132, %v136
  %v139 = vmul.f32 %v62, %v137
  %v140 = vmul.f32 %v63, %v137
  %v141 = vld [vmem:[%s1] sm:$0xff]
  %v143 = vperm.slane %v141, 0
  %v144 = vperm.slane %v141, 1
  %v145 = vperm.slane %v141, 2
  %v146 = vperm.slane %v141, 3
  %v147 = vperm.slane %v141, 4
  %v148 = vperm.slane %v141, 5
  %v149 = vperm.slane %v141, 6
  %v150 = vperm.slane %v141, 7
  %v151 = vrot.slane %v144, 6
  %v152 = vrot.slane %v145, 4
  %v153 = vrot.slane %v146, 2
  %v154 = vrot.slane %v148, 6
  %v155 = vrot.slane %v149, 4
  %v156 = vrot.slane %v150, 2
  %v157 = vsel %vm37, %v143, %v151
  %vm158 = vcmask 1045508
  %v159 = vsel %vm158, %v152, %v153
  %vm160 = vcmask 1043456
  %v161 = vsel %vm160, %v157, %v159
  %v162 = vsel %vm37, %v147, %v154
  %v163 = vsel %vm158, %v155, %v156
  %v164 = vsel %vm160, %v162, %v163
  %v167 = vmul.f32 %v139, %v161
  %v168 = vmul.f32 %v140, %v164
  %v169 = vld [vmem:[%s2] sm:$0xff]
  %v171 = vperm.slane %v169, 0
  %v172 = vperm.slane %v169, 1
  %v173 = vperm.slane %v169, 2
  %v174 = vperm.slane %v169, 3
  %v175 = vperm.slane %v169, 4
  %v176 = vperm.slane %v169, 5
  %v177 = vperm.slane %v169, 6
  %v178 = vperm.slane %v169, 7
  %v179 = vrot.slane %v172, 6
  %v180 = vrot.slane %v173, 4
  %v181 = vrot.slane %v174, 2
  %v182 = vrot.slane %v176, 6
  %v183 = vrot.slane %v177, 4
  %v184 = vrot.slane %v178, 2
  %v185 = vsel %vm37, %v171, %v179
  %v186 = vsel %vm158, %v180, %v181
  %v187 = vsel %vm160, %v185, %v186
  %v188 = vsel %vm37, %v175, %v182
  %v189 = vsel %vm158, %v183, %v184
  %v190 = vsel %vm160, %v188, %v189
  %v193 = vadd.f32 %v167, %v187
  %v194 = vadd.f32 %v168, %v190
  %195 = vst [vmem:[%s3] sm:$0xff] %v193
  %196 = vst [vmem:[%s3 + $0x8] sm:$0xff] %v194
  // Predicated region
  $region14: #{layer_norm.1} parent=0 // pred_check
    _
  $region15: #{layer_norm.1} parent=0 // pred_check_branch
    %198 = sbr.rel (0) target = $region17
  $region16: #{layer_norm.1} parent=0 // pred_region
    _
  $region17: #{layer_norm.1} parent=0 // pred_fallthru
    _
  // Predicated region
  $region18: #{layer_norm.1} parent=0 // pred_check
    _
  $region19: #{layer_norm.1} parent=0 // pred_check_branch
    %200 = sbr.rel (0) target = $region21
  $region20: #{layer_norm.1} parent=0 // pred_region
    _
  $region21: #{layer_norm.1} parent=0 // pred_fallthru
    _

</llo_original>
